<compile_context>
chip_gen: v7x
topology: tpu7x:2x2x1
jax: 0.10.0
libtpu: 0.0.40
codegen_flags: <defaults>
</compile_context>

<pallas_src>
import jax
import jax.numpy as jnp
from jax.experimental import pallas as pl
from jax.experimental.pallas import tpu as pltpu


def _decoder_kernel(z_ref, bg_ref, profile_ref, rate_ref):
    # z/bg blocks are (Bt, S); profile block is (Bt, 1, Pt); output (Bt, S, Pt).
    # (Bt, S, 1) * (Bt, 1, Pt) + (Bt, S, 1)  -- pure VPU broadcast FMA; the
    # store path / HBM write bandwidth is the bottleneck.
    z = z_ref[...][:, :, None]          # (Bt, S, 1), small XLU relayout
    bg = bg_ref[...][:, :, None]        # (Bt, S, 1)
    rate_ref[...] = z * profile_ref[...] + bg


def _round_up(x, m):
    return ((x + m - 1) // m) * m


def _pick_pixel_tile(p_pad, max_lane_block=8192):
    """p_pad is a multiple of 128.  Use the full pixel axis if it fits;
    otherwise the largest 128-multiple divisor <= max_lane_block (grow the
    lane / HBM-contiguous axis before the batch axis)."""
    if p_pad <= max_lane_block:
        return p_pad
    pt = (max_lane_block // 128) * 128
    while pt > 128 and p_pad % pt != 0:
        pt -= 128
    return pt


def _pick_batch_tile(B, S, Pt, n_pixel_blocks, target_bytes=4 << 20, min_steps=4):
    """Pick a batch tile: a divisor of B, preferring sublane-aligned values
    (multiple of 8 or == B) so the 2D z/bg blocks satisfy the (8, 128) block
    rule; sized so the padded f32 output block is ~<= target_bytes; and shrunk
    (when possible) until the grid has >= min_steps total steps so megacore
    sharding / prefetch stay pipelined."""
    per_row = _round_up(S, 8) * Pt * 4          # padded output bytes per batch row
    divs = [d for d in range(1, B + 1) if B % d == 0]
    aligned = [d for d in divs if d % 8 == 0 or d == B]
    # Only fall back to unaligned divisors if even the smallest aligned tile
    # would need an unreasonably large VMEM block.
    pool = aligned if min(aligned) * per_row <= 2 * target_bytes else divs
    cap = max(1, target_bytes // per_row)
    fits = [d for d in pool if d <= cap] or [min(pool)]
    bt = max(fits)
    while (B // bt) * n_pixel_blocks < min_steps:
        smaller = [d for d in pool if d < bt]
        if not smaller:
            break
        bt = max(smaller)
    return bt


def decoder_forward(q_I_loc, q_I_scale, q_bg_loc, q_bg_scale, profile,
                    key, mc_samples=100):
    """q_*_loc / q_*_scale: [B] float32, profile: [B, P] float32.

    Returns (rate [B, mc_samples, P] float32, (z [B, S], bg [B, S]))."""
    B, P = profile.shape
    S = mc_samples

    k1, k2 = jax.random.split(key)
    eps_I = jax.random.normal(k1, (B, S), dtype=jnp.float32)
    eps_bg = jax.random.normal(k2, (B, S), dtype=jnp.float32)

    # Reparameterized samples; tiny (2*B*S) and fuses with random.normal in XLA.
    z = q_I_loc.astype(jnp.float32)[:, None] + q_I_scale.astype(jnp.float32)[:, None] * eps_I
    bg = q_bg_loc.astype(jnp.float32)[:, None] + q_bg_scale.astype(jnp.float32)[:, None] * eps_bg

    # Pad the pixel axis to a lane multiple so stores are unmasked and the
    # pixel tile stays bounded even for large, unaligned P.
    P_pad = _round_up(P, 128)
    prof = profile.astype(jnp.float32)
    if P_pad != P:
        prof = jnp.pad(prof, ((0, 0), (0, P_pad - P)))
    profile3 = prof[:, None, :]                                   # [B, 1, P_pad]

    Pt = _pick_pixel_tile(P_pad)
    n_pixel_blocks = P_pad // Pt
    Bt = _pick_batch_tile(B, S, Pt, n_pixel_blocks)
    grid = (B // Bt, n_pixel_blocks)

    grid_spec = pl.GridSpec(
        grid=grid,
        in_specs=[
            pl.BlockSpec((Bt, S), lambda i, j: (i, 0)),           # z   [B, S]
            pl.BlockSpec((Bt, S), lambda i, j: (i, 0)),           # bg  [B, S]
            pl.BlockSpec((Bt, 1, Pt), lambda i, j: (i, 0, j)),    # profile [B,1,P_pad]
        ],
        out_specs=pl.BlockSpec((Bt, S, Pt), lambda i, j: (i, 0, j)),
    )

    cost = pl.CostEstimate(
        flops=2 * B * S * P_pad,
        transcendentals=0,
        bytes_accessed=4 * (B * S * P_pad + B * P_pad + 2 * B * S),
    )

    rate = pl.pallas_call(
        _decoder_kernel,
        out_shape=jax.ShapeDtypeStruct((B, S, P_pad), jnp.float32),
        grid_spec=grid_spec,
        compiler_params=pltpu.CompilerParams(
            dimension_semantics=("parallel", "parallel"),
            vmem_limit_bytes=32 * 1024 * 1024,   # explicit for v5e's 16 MiB default
        ),
        cost_estimate=cost,
    )(z, bg, profile3)

    if P_pad != P:
        rate = rate[:, :, :P]

    return rate, (z, bg)


def _reference(z, bg, profile):
    # Pure-JAX reference mirroring the PyTorch broadcast semantics.
    return z[:, :, None] * profile[:, None, :] + bg[:, :, None]   # [B, S, P]


if __name__ == "__main__":
    key = jax.random.PRNGKey(0)
    k_loc_i, k_sc_i, k_loc_b, k_sc_b, k_prof, k_eps = jax.random.split(key, 6)

    B, P = 32, 128
    S = 100  # mc_samples (module default)

    q_I_loc = jax.random.normal(k_loc_i, (B,), dtype=jnp.float32) * 2.0 + 5.0
    q_I_scale = jax.nn.softplus(jax.random.normal(k_sc_i, (B,), dtype=jnp.float32)) + 0.1
    q_bg_loc = jax.random.normal(k_loc_b, (B,), dtype=jnp.float32) * 0.5
    q_bg_scale = jax.nn.softplus(jax.random.normal(k_sc_b, (B,), dtype=jnp.float32)) + 0.05
    profile = jax.nn.softmax(jax.random.normal(k_prof, (B, P), dtype=jnp.float32), axis=-1)

    rate, (z, bg) = decoder_forward(
        q_I_loc, q_I_scale, q_bg_loc, q_bg_scale, profile, k_eps, mc_samples=S)
    rate = jax.block_until_ready(rate)

    ref = _reference(z, bg, profile)
    assert rate.shape == (B, S, P), rate.shape
    assert jnp.allclose(rate, ref, atol=1e-5, rtol=1e-5), "mismatch vs reference"

    print("KERNEL_OK")
</pallas_src>

<mosaic_0001>
module attributes {stable_mosaic.version = 11 : i64} {
  func.func @_decoder_kernel(%arg0: i32, %arg1: i32, %arg2: memref<8x100xf32, #tpu.memory_space<vmem>>, %arg3: memref<8x100xf32, #tpu.memory_space<vmem>>, %arg4: memref<8x1x128xf32, #tpu.memory_space<vmem>>, %arg5: memref<8x100x128xf32, #tpu.memory_space<vmem>>) attributes {dimension_semantics = [#tpu.dimension_semantics<parallel>, #tpu.dimension_semantics<parallel>], iteration_bounds = array<i64: 4, 1>, scalar_prefetch = 0 : i64, scratch_operands = 0 : i64, tpu.core_type = #tpu.core_type<tc>, window_params = [{transform_indices = @transform_0, window_bounds = array<i64: 8, 100>}, {transform_indices = @transform_1, window_bounds = array<i64: 8, 100>}, {transform_indices = @transform_2, window_bounds = array<i64: 8, 1, 128>}, {transform_indices = @transform_3, window_bounds = array<i64: 8, 100, 128>}]} {
    %c0 = arith.constant 0 : index
    %c0_0 = arith.constant 0 : index
    %0 = vector.load %arg2[%c0, %c0_0] : memref<8x100xf32, #tpu.memory_space<vmem>>, vector<8x100xf32>
    %1 = vector.shape_cast %0 : vector<8x100xf32> to vector<8x100x1xf32>
    %c0_1 = arith.constant 0 : index
    %c0_2 = arith.constant 0 : index
    %2 = vector.load %arg3[%c0_1, %c0_2] : memref<8x100xf32, #tpu.memory_space<vmem>>, vector<8x100xf32>
    %3 = vector.shape_cast %2 : vector<8x100xf32> to vector<8x100x1xf32>
    %c0_3 = arith.constant 0 : index
    %c0_4 = arith.constant 0 : index
    %c0_5 = arith.constant 0 : index
    %4 = vector.load %arg4[%c0_3, %c0_4, %c0_5] : memref<8x1x128xf32, #tpu.memory_space<vmem>>, vector<8x1x128xf32>
    %5 = vector.broadcast %1 : vector<8x100x1xf32> to vector<8x100x128xf32>
    %6 = vector.broadcast %4 : vector<8x1x128xf32> to vector<8x100x128xf32>
    %7 = arith.mulf %5, %6 : vector<8x100x128xf32>
    %8 = vector.broadcast %3 : vector<8x100x1xf32> to vector<8x100x128xf32>
    %9 = arith.addf %7, %8 : vector<8x100x128xf32>
    %c0_6 = arith.constant 0 : index
    %c0_7 = arith.constant 0 : index
    %c0_8 = arith.constant 0 : index
    %10 = vector.load %arg5[%c0_6, %c0_7, %c0_8] : memref<8x100x128xf32, #tpu.memory_space<vmem>>, vector<8x100x128xf32>
    tpu.vector_store %arg5[%c0_6, %c0_7, %c0_8], %9 {strides = array<i32>} : memref<8x100x128xf32, #tpu.memory_space<vmem>>, vector<8x100x128xf32>,
    return
  }
  func.func @transform_0(%arg0: i32, %arg1: i32) -> (i32, i32) {
    %c0_i32 = arith.constant 0 : i32
    %c0_i32_0 = arith.constant 0 : i32
    return %arg0, %c0_i32 : i32, i32
  }
  func.func @transform_1(%arg0: i32, %arg1: i32) -> (i32, i32) {
    %c0_i32 = arith.constant 0 : i32
    %c0_i32_0 = arith.constant 0 : i32
    return %arg0, %c0_i32 : i32, i32
  }
  func.func @transform_2(%arg0: i32, %arg1: i32) -> (i32, i32, i32) {
    %c0_i32 = arith.constant 0 : i32
    %c0_i32_0 = arith.constant 0 : i32
    return %arg0, %c0_i32, %arg1 : i32, i32, i32
  }
  func.func @transform_3(%arg0: i32, %arg1: i32) -> (i32, i32, i32) {
    %c0_i32 = arith.constant 0 : i32
    %c0_i32_0 = arith.constant 0 : i32
    return %arg0, %c0_i32, %arg1 : i32, i32, i32
  }
}

</mosaic_0001>

<llo_original>
// kernel: tpu_custom_call.1
$region0: #{tpu_custom_call.1}
  #allocation0 [shape = 'u32[]', space=smem, size = 0x4, offset = 0x4, fixed_abs, tag = 'smem constant byte address 0x4 - core index']
  #allocation1 [shape = 'u32[144,128]{1,0:T(1,128)}', space=vmem, size = 0x12000, scoped, tag = 'internal scratch']
  %s0 = inlined_call_operand.hbm [shape: f32[32,100], index: 0, kind: input, shape index: {}]
  %s1 = inlined_call_operand.hbm [shape: f32[32,100], index: 1, kind: input, shape index: {}]
  %s2 = inlined_call_operand.hbm [shape: f32[32,1,128], index: 2, kind: input, shape index: {}]
  %s3 = inlined_call_operand.vmem [shape: f32[32,100,128], index: 3, kind: output, shape index: {}]
  %s4 = sld [smem:[#allocation0]]
  $region57: #{tpu_custom_call.1} parent=0
    _
  %s6 = ssub.s32 1, %s4
  %s7 = scalar_select 0, %s6, %s4
  $region1: #{tpu_custom_call.1} parent=0
    #allocation2 [shape = 'u8[8192]{0}', space=vmem, size = 0x2000, scoped, tag = 'input window, operand 0']
    #allocation3 [shape = 's32[2]{0}', space=sflag, size = 0x8, scoped, tag = 'scoped memory for tpu_custom_call.1']
    #allocation4 [shape = 'u8[8192]{0}', space=vmem, size = 0x2000, scoped, tag = 'input window, operand 1']
    #allocation5 [shape = 's32[2]{0}', space=sflag, size = 0x8, scoped, tag = 'scoped memory for tpu_custom_call.1']
    #allocation6 [shape = 'u8[8192]{0}', space=vmem, size = 0x2000, scoped, tag = 'input window, operand 2']
    %8 = vsyncpa [#allocation3], 0
    %s9 = scalar_lea.sflag [#allocation3], 1
    %10 = vsyncpa %s9, 0
    %11 = vsyncpa [#allocation5], 0
    %s12 = scalar_lea.sflag [#allocation5], 1
    %13 = vsyncpa %s12, 0
    loop: start=0, step=1, limit=6
    $region2: #{tpu_custom_call.1} parent=1 // loop_pre_header
      _
    $region3: #{tpu_custom_call.1} parent=1 // loop_header
      %s15 = sphi 0, %s19
      %p16 = scmp.ge.s32.totalorder %s15, 6
      %s22 = sphi 0, %s34
      %s23 = sphi 0, %s30
      %s24 = sphi 0, %s22
      %s25 = sphi 0, %s23
      %s26 = sphi 0, %s24
      %s27 = sphi 0, %s25
      %s37 = sphi 0, %s39
      %s40 = sphi 0, %s37
      %s41 = sphi 0, %s40
      %s57 = sphi 0, %s41
      %s63 = sphi 0, %s65
      %s66 = sphi 0, %s63
      %s67 = sphi 0, %s66
      %s83 = sphi 0, %s67
      %s91 = sphi 0, %s93
      %s94 = sphi 0, %s91
      %s95 = sphi 0, %s94
      %s111 = sphi 0, %s95
      %s119 = sphi 0, %s121
      %s122 = sphi 0, %s119
      %s123 = sphi 0, %s122
      %s139 = sphi 0, %s123
    $region4: #{tpu_custom_call.1} parent=1 // loop_header_branch
      %18 = sbr.rel (%p16) target = $region8
    $region5: #{tpu_custom_call.1} parent=1 // loop_body
      %s20 = ssub.s32 %s15, 1
      %s21 = ssub.s32 %s15, 2
      %s28 = sadd.s32 1, %s23
      %p29 = scmp.ge.s32.totalorder %s28, 1
      %s30 = scalar_select %p29, 0, %s28
      %s31 = sadd.s32 1, %s22
      %s32 = scalar_select %p29, %s31, %s22
      %p33 = scmp.ge.s32.totalorder %s32, 4
      %s34 = scalar_select %p33, 0, %s32
      %s35 = ssub.s32 %s22, %s34
      %p36 = scmp.eq.s32.totalorder %s35, 0
      %s38 = sadd.s32 %s37, 1
      %s39 = scalar_select %p36, %s37, %s38
      %p42 = pneg %p36
      %p43 = scmp.eq.s32.totalorder %s15, 3
      %p44 = por %p42, %p43
      %p45 = scmp.ne.s32.totalorder %s37, %s40
      %p46 = scmp.eq.s32.totalorder %s15, 0
      %p47 = por %p45, %p46
      %p48 = scmp.ne.s32.totalorder %s37, %s40
      %p49 = scmp.eq.s32.totalorder %s20, 3
      %p50 = por %p48, %p49
      %p51 = scmp.ne.s32.totalorder %s40, %s41
      %p52 = scmp.eq.s32.totalorder %s20, 0
      %p53 = por %p51, %p52
      %p54 = scmp.ne.s32.totalorder %s40, %s41
      %p55 = scmp.eq.s32.totalorder %s21, 3
      %p56 = por %p54, %p55
      %p58 = scmp.ne.s32.totalorder %s41, %s57
      %p59 = scmp.eq.s32.totalorder %s21, 0
      %p60 = por %p58, %p59
      %s61 = ssub.s32 %s22, %s34
      %p62 = scmp.eq.s32.totalorder %s61, 0
      %s64 = sadd.s32 %s63, 1
      %s65 = scalar_select %p62, %s63, %s64
      %p68 = pneg %p62
      %p69 = scmp.eq.s32.totalorder %s15, 3
      %p70 = por %p68, %p69
      %p71 = scmp.ne.s32.totalorder %s63, %s66
      %p72 = scmp.eq.s32.totalorder %s15, 0
      %p73 = por %p71, %p72
      %p74 = scmp.ne.s32.totalorder %s63, %s66
      %p75 = scmp.eq.s32.totalorder %s20, 3
      %p76 = por %p74, %p75
      %p77 = scmp.ne.s32.totalorder %s66, %s67
      %p78 = scmp.eq.s32.totalorder %s20, 0
      %p79 = por %p77, %p78
      %p80 = scmp.ne.s32.totalorder %s66, %s67
      %p81 = scmp.eq.s32.totalorder %s21, 3
      %p82 = por %p80, %p81
      %p84 = scmp.ne.s32.totalorder %s67, %s83
      %p85 = scmp.eq.s32.totalorder %s21, 0
      %p86 = por %p84, %p85
      %s87 = ssub.s32 %s22, %s34
      %s88 = ssub.s32 %s23, %s30
      %s89 = sor.u32 %s87, %s88
      %p90 = scmp.eq.s32.totalorder %s89, 0
      %s92 = sadd.s32 %s91, 1
      %s93 = scalar_select %p90, %s91, %s92
      %p96 = pneg %p90
      %p97 = scmp.eq.s32.totalorder %s15, 3
      %p98 = por %p96, %p97
      %p99 = scmp.ne.s32.totalorder %s91, %s94
      %p100 = scmp.eq.s32.totalorder %s15, 0
      %p101 = por %p99, %p100
      %p102 = scmp.ne.s32.totalorder %s91, %s94
      %p103 = scmp.eq.s32.totalorder %s20, 3
      %p104 = por %p102, %p103
      %p105 = scmp.ne.s32.totalorder %s94, %s95
      %p106 = scmp.eq.s32.totalorder %s20, 0
      %p107 = por %p105, %p106
      %p108 = scmp.ne.s32.totalorder %s94, %s95
      %p109 = scmp.eq.s32.totalorder %s21, 3
      %p110 = por %p108, %p109
      %p112 = scmp.ne.s32.totalorder %s95, %s111
      %p113 = scmp.eq.s32.totalorder %s21, 0
      %p114 = por %p112, %p113
      %s115 = ssub.s32 %s22, %s34
      %s116 = ssub.s32 %s23, %s30
      %s117 = sor.u32 %s115, %s116
      %p118 = scmp.eq.s32.totalorder %s117, 0
      %s120 = sadd.s32 %s119, 1
      %s121 = scalar_select %p118, %s119, %s120
      %p124 = pneg %p118
      %p125 = scmp.eq.s32.totalorder %s15, 3
      %p126 = por %p124, %p125
      %p127 = scmp.ne.s32.totalorder %s119, %s122
      %p128 = scmp.eq.s32.totalorder %s15, 0
      %p129 = por %p127, %p128
      %p130 = scmp.ne.s32.totalorder %s119, %s122
      %p131 = scmp.eq.s32.totalorder %s20, 3
      %p132 = por %p130, %p131
      %p133 = scmp.ne.s32.totalorder %s122, %s123
      %p134 = scmp.eq.s32.totalorder %s20, 0
      %p135 = por %p133, %p134
      %p136 = scmp.ne.s32.totalorder %s122, %s123
      %p137 = scmp.eq.s32.totalorder %s21, 3
      %p138 = por %p136, %p137
      %p140 = scmp.ne.s32.totalorder %s123, %s139
      %p141 = scmp.eq.s32.totalorder %s21, 0
      %p142 = por %p140, %p141
      %p143 = scmp.le.s32.totalorder 1, %s15
      %p144 = scmp.lt.s32.totalorder %s15, 5
      %p145 = pnand %p143, %p144
      %p146 = pneg %p145
      // Predicated region
      $region9: #{tpu_custom_call.1} parent=5 // pred_check
        _
      $region10: #{tpu_custom_call.1} parent=5 // pred_check_branch
        %148 = sbr.rel (%p145) target = $region12
      $region11: #{tpu_custom_call.1} parent=5 // pred_region
        %s149 = ssub.s32 %s15, 1
      $region12: #{tpu_custom_call.1} parent=5 // pred_fallthru
        _
      %p150 = scmp.lt.s32.totalorder %s15, 4
      // Predicated region
      $region13: #{tpu_custom_call.1} parent=5 // pred_check
        %p151 = pneg %p150
      $region14: #{tpu_custom_call.1} parent=5 // pred_check_branch
        %153 = sbr.rel (%p151) target = $region16
      $region15: #{tpu_custom_call.1} parent=5 // pred_region
        // Predicated region
        $region17: #{tpu_custom_call.1} parent=15 // pred_check
          %p154 = pneg %p47
        $region18: #{tpu_custom_call.1} parent=15 // pred_check_branch
          %156 = sbr.rel (%p154) target = $region20
        $region19: #{tpu_custom_call.1} parent=15 // pred_region
          %s157 = sand.u32 %s37, 1
          %s158 = scalar_lea.sflag [#allocation3], %s157
          %s159 = sand.u32 %s37, 1
          %s160 = smul.addr %s159, 8
          %s161 = scalar_lea.vmem [#allocation2], %s160
          %s163 = ssub.s32 128, 128
          %164 = vsyncadd %s158, %s163
          %s165 = smul.addr %s22, 128
          %s166 = scalar_lea.hbm %s0, %s165
          %s168 = sshll.u32 %s161, 4
          %s169 = int_to_ptr.vmem [resolvable:$true] %s168
          %171 = dma.hbm_to_vmem [thread:$0]  %s166, 128, %s169, %s158
        $region20: #{tpu_custom_call.1} parent=15 // pred_fallthru
          _
        // Predicated region
        $region21: #{tpu_custom_call.1} parent=15 // pred_check
          %p172 = pneg %p73
        $region22: #{tpu_custom_call.1} parent=15 // pred_check_branch
          %174 = sbr.rel (%p172) target = $region24
        $region23: #{tpu_custom_call.1} parent=15 // pred_region
          %s175 = sand.u32 %s15, 1
          %s176 = scalar_lea.sflag [#allocation5], %s175
          %s177 = sand.u32 %s63, 1
          %s178 = smul.addr %s177, 8
          %s179 = scalar_lea.vmem [#allocation4], %s178
          %s181 = ssub.s32 128, 128
          %182 = vsyncadd %s176, %s181
          %s183 = smul.addr %s22, 128
          %s184 = scalar_lea.hbm %s1, %s183
          %s186 = sshll.u32 %s179, 4
          %s187 = int_to_ptr.vmem [resolvable:$true] %s186
          %189 = dma.hbm_to_vmem [thread:$0]  %s184, 128, %s187, %s176
        $region24: #{tpu_custom_call.1} parent=15 // pred_fallthru
          _
        // Predicated region
        $region25: #{tpu_custom_call.1} parent=15 // pred_check
          %p190 = pneg %p101
        $region26: #{tpu_custom_call.1} parent=15 // pred_check_branch
          %192 = sbr.rel (%p190) target = $region28
        $region27: #{tpu_custom_call.1} parent=15 // pred_region
          %s193 = sand.u32 %s15, 1
          %s194 = scalar_lea.sflag [#allocation5], %s193
          %s195 = sand.u32 %s91, 1
          %s196 = smul.addr %s195, 8
          %s197 = scalar_lea.vmem [#allocation6], %s196
          %s198 = smul.u32 8, %s22
          %s200 = ssub.s32 128, 128
          %201 = vsyncadd %s194, %s200
          %s202 = sadd.s32 %s23, %s198
          %s203 = smul.addr %s202, 16
          %s204 = scalar_lea.hbm %s2, %s203
          %s205 = sshll.u32 %s197, 4
          %s206 = int_to_ptr.vmem [resolvable:$true] %s205
          %211 = dma.hbm_to_vmem [thread:$0]  %s204, 128, %s206, %s194, 16, 16, 1
        $region28: #{tpu_custom_call.1} parent=15 // pred_fallthru
          _
      $region16: #{tpu_custom_call.1} parent=5 // pred_fallthru
        _
      %p212 = scmp.le.s32.totalorder 1, %s15
      %p213 = scmp.lt.s32.totalorder %s15, 5
      %p214 = pnand %p212, %p213
      %p215 = pneg %p214
      // Predicated region
      $region29: #{tpu_custom_call.1} parent=5 // pred_check
        _
      $region30: #{tpu_custom_call.1} parent=5 // pred_check_branch
        %217 = sbr.rel (%p214) target = $region32
      $region31: #{tpu_custom_call.1} parent=5 // pred_region
        %s218 = ssub.s32 %s15, 1
        %s219 = sand.u32 %s40, 1
        %s220 = scalar_lea.sflag [#allocation3], %s219
        %s221 = sand.u32 %s40, 1
        %s222 = smul.addr %s221, 8
        %s223 = scalar_lea.vmem [#allocation2], %s222
        // Predicated region
        $region33: #{tpu_custom_call.1} parent=31 // pred_check
          %p224 = pneg %p53
        $region34: #{tpu_custom_call.1} parent=31 // pred_check_branch
          %226 = sbr.rel (%p224) target = $region36
        $region35: #{tpu_custom_call.1} parent=31 // pred_region
          %227 = dma.done %s220, 128
        $region36: #{tpu_custom_call.1} parent=31 // pred_fallthru
          _
        %s228 = sand.u32 %s20, 1
        %s229 = scalar_lea.sflag [#allocation5], %s228
        %s230 = sand.u32 %s66, 1
        %s231 = smul.addr %s230, 8
        %s232 = scalar_lea.vmem [#allocation4], %s231
        // Predicated region
        $region37: #{tpu_custom_call.1} parent=31 // pred_check
          %p233 = pneg %p79
        $region38: #{tpu_custom_call.1} parent=31 // pred_check_branch
          %235 = sbr.rel (%p233) target = $region40
        $region39: #{tpu_custom_call.1} parent=31 // pred_region
          %236 = dma.done %s229, 128
        $region40: #{tpu_custom_call.1} parent=31 // pred_fallthru
          _
        %s237 = sand.u32 %s20, 1
        %s238 = scalar_lea.sflag [#allocation5], %s237
        %s239 = sand.u32 %s94, 1
        %s240 = smul.addr %s239, 8
        %s241 = scalar_lea.vmem [#allocation6], %s240
        // Predicated region
        $region41: #{tpu_custom_call.1} parent=31 // pred_check
          %p242 = pneg %p107
        $region42: #{tpu_custom_call.1} parent=31 // pred_check_branch
          %244 = sbr.rel (%p242) target = $region44
        $region43: #{tpu_custom_call.1} parent=31 // pred_region
          %245 = dma.done %s238, 128
        $region44: #{tpu_custom_call.1} parent=31 // pred_fallthru
          _
        %s246 = sand.u32 %s40, 1
        %s247 = scalar_lea.sflag [#allocation3], %s246
        %s248 = sand.u32 %s40, 1
        %s249 = smul.addr %s248, 8
        %s250 = scalar_lea.vmem [#allocation2], %s249
        %p251 = pneg %p53
        %p252 = pneg %p50
        %s253 = sand.u32 %s20, 1
        %s254 = scalar_lea.sflag [#allocation5], %s253
        %s255 = sand.u32 %s66, 1
        %s256 = smul.addr %s255, 8
        %s257 = scalar_lea.vmem [#allocation4], %s256
        %p258 = pneg %p79
        %p259 = pneg %p76
        %s260 = sand.u32 %s20, 1
        %s261 = scalar_lea.sflag [#allocation5], %s260
        %s262 = sand.u32 %s94, 1
        %s263 = smul.addr %s262, 8
        %s264 = scalar_lea.vmem [#allocation6], %s263
        %p265 = pneg %p107
        %p266 = pneg %p104
        %p267 = pneg %p135
        %p268 = pneg %p132
        %s269 = smul.u32 8, %s24
        %p270 = scmp.lt.s32.totalorder %s269, 31
        %s271 = scalar_select %p270, %s269, 31
        %p272 = scmp.lt.s32.totalorder %s25, 0
        %s273 = scalar_select %p272, %s25, 0
        %s274 = smul.addr %s271, 13
        %s275 = sadd.s32 %s273, %s274
        %s276 = smul.addr %s275, 8
        %s277 = scalar_lea.vmem %s3, %s276
        %s278 = smul.u32 8, %s24
        %s279 = smul.u32 8, %s24
        %p280 = scmp.lt.s32.totalorder %s279, 31
        %s281 = scalar_select %p280, %s279, 31
        %p282 = scmp.lt.s32.totalorder %s25, 0
        %s283 = scalar_select %p282, %s25, 0
        %s284 = smul.addr %s281, 13
        %s285 = sadd.s32 %s283, %s284
        %s286 = smul.addr %s285, 8
        %s287 = scalar_lea.vmem %s3, %s286
        %s288 = smul.u32 8, %s24
        %v289 = vld [vmem:[%s223] sm:$0xff]
        %v290 = vlaneseq
        %v291 = vshrl.u32 %v290, 7
        %v292 = vsub.s32 0, %v291
        %v293 = vrot.slane %v289, %v292
        %295 = vbcast.lane.b32.xlu0 %v293, 256
        %v296 = vpop.permute.xlu0 %295
        %s298 = sor.u32 256, 8
        %299 = vbcast.lane.b32.xlu0 %v293, %s298
        %v300 = vpop.permute.xlu0 %299
        %s302 = sor.u32 256, 16
        %303 = vbcast.lane.b32.xlu0 %v293, %s302
        %v304 = vpop.permute.xlu0 %303
        %s306 = sor.u32 256, 24
        %307 = vbcast.lane.b32.xlu0 %v293, %s306
        %v308 = vpop.permute.xlu0 %307
        %s310 = sor.u32 256, 32
        %311 = vbcast.lane.b32.xlu0 %v293, %s310
        %v312 = vpop.permute.xlu0 %311
        %s314 = sor.u32 256, 40
        %315 = vbcast.lane.b32.xlu0 %v293, %s314
        %v316 = vpop.permute.xlu0 %315
        %s318 = sor.u32 256, 48
        %319 = vbcast.lane.b32.xlu0 %v293, %s318
        %v320 = vpop.permute.xlu0 %319
        %s322 = sor.u32 256, 56
        %323 = vbcast.lane.b32.xlu0 %v293, %s322
        %v324 = vpop.permute.xlu0 %323
        %s326 = sor.u32 256, 64
        %327 = vbcast.lane.b32.xlu0 %v293, %s326
        %v328 = vpop.permute.xlu0 %327
        %s330 = sor.u32 256, 72
        %331 = vbcast.lane.b32.xlu0 %v293, %s330
        %v332 = vpop.permute.xlu0 %331
        %s334 = sor.u32 256, 80
        %335 = vbcast.lane.b32.xlu0 %v293, %s334
        %v336 = vpop.permute.xlu0 %335
        %s338 = sor.u32 256, 88
        %339 = vbcast.lane.b32.xlu0 %v293, %s338
        %v340 = vpop.permute.xlu0 %339
        %s342 = sor.u32 256, 96
        %343 = vbcast.lane.b32.xlu0 %v293, %s342
        %v344 = vpop.permute.xlu0 %343
        %v345 = vlaneseq
        %v346 = vshrl.u32 %v345, 7
        %v347 = vsub.s32 1, %v346
        %v348 = vrot.slane %v289, %v347
        %350 = vbcast.lane.b32.xlu0 %v348, 256
        %v351 = vpop.permute.xlu0 %350
        %s353 = sor.u32 256, 8
        %354 = vbcast.lane.b32.xlu0 %v348, %s353
        %v355 = vpop.permute.xlu0 %354
        %s357 = sor.u32 256, 16
        %358 = vbcast.lane.b32.xlu0 %v348, %s357
        %v359 = vpop.permute.xlu0 %358
        %s361 = sor.u32 256, 24
        %362 = vbcast.lane.b32.xlu0 %v348, %s361
        %v363 = vpop.permute.xlu0 %362
        %s365 = sor.u32 256, 32
        %366 = vbcast.lane.b32.xlu0 %v348, %s365
        %v367 = vpop.permute.xlu0 %366
        %s369 = sor.u32 256, 40
        %370 = vbcast.lane.b32.xlu0 %v348, %s369
        %v371 = vpop.permute.xlu0 %370
        %s373 = sor.u32 256, 48
        %374 = vbcast.lane.b32.xlu0 %v348, %s373
        %v375 = vpop.permute.xlu0 %374
        %s377 = sor.u32 256, 56
        %378 = vbcast.lane.b32.xlu0 %v348, %s377
        %v379 = vpop.permute.xlu0 %378
        %s381 = sor.u32 256, 64
        %382 = vbcast.lane.b32.xlu0 %v348, %s381
        %v383 = vpop.permute.xlu0 %382
        %s385 = sor.u32 256, 72
        %386 = vbcast.lane.b32.xlu0 %v348, %s385
        %v387 = vpop.permute.xlu0 %386
        %s389 = sor.u32 256, 80
        %390 = vbcast.lane.b32.xlu0 %v348, %s389
        %v391 = vpop.permute.xlu0 %390
        %s393 = sor.u32 256, 88
        %394 = vbcast.lane.b32.xlu0 %v348, %s393
        %v395 = vpop.permute.xlu0 %394
        %s397 = sor.u32 256, 96
        %398 = vbcast.lane.b32.xlu0 %v348, %s397
        %v399 = vpop.permute.xlu0 %398
        %v400 = vlaneseq
        %v401 = vshrl.u32 %v400, 7
        %v402 = vsub.s32 2, %v401
        %v403 = vrot.slane %v289, %v402
        %405 = vbcast.lane.b32.xlu0 %v403, 256
        %v406 = vpop.permute.xlu0 %405
        %s408 = sor.u32 256, 8
        %409 = vbcast.lane.b32.xlu0 %v403, %s408
        %v410 = vpop.permute.xlu0 %409
        %s412 = sor.u32 256, 16
        %413 = vbcast.lane.b32.xlu0 %v403, %s412
        %v414 = vpop.permute.xlu0 %413
        %s416 = sor.u32 256, 24
        %417 = vbcast.lane.b32.xlu0 %v403, %s416
        %v418 = vpop.permute.xlu0 %417
        %s420 = sor.u32 256, 32
        %421 = vbcast.lane.b32.xlu0 %v403, %s420
        %v422 = vpop.permute.xlu0 %421
        %s424 = sor.u32 256, 40
        %425 = vbcast.lane.b32.xlu0 %v403, %s424
        %v426 = vpop.permute.xlu0 %425
        %s428 = sor.u32 256, 48
        %429 = vbcast.lane.b32.xlu0 %v403, %s428
        %v430 = vpop.permute.xlu0 %429
        %s432 = sor.u32 256, 56
        %433 = vbcast.lane.b32.xlu0 %v403, %s432
        %v434 = vpop.permute.xlu0 %433
        %s436 = sor.u32 256, 64
        %437 = vbcast.lane.b32.xlu0 %v403, %s436
        %v438 = vpop.permute.xlu0 %437
        %s440 = sor.u32 256, 72
        %441 = vbcast.lane.b32.xlu0 %v403, %s440
        %v442 = vpop.permute.xlu0 %441
        %s444 = sor.u32 256, 80
        %445 = vbcast.lane.b32.xlu0 %v403, %s444
        %v446 = vpop.permute.xlu0 %445
        %s448 = sor.u32 256, 88
        %449 = vbcast.lane.b32.xlu0 %v403, %s448
        %v450 = vpop.permute.xlu0 %449
        %s452 = sor.u32 256, 96
        %453 = vbcast.lane.b32.xlu0 %v403, %s452
        %v454 = vpop.permute.xlu0 %453
        %v455 = vlaneseq
        %v456 = vshrl.u32 %v455, 7
        %v457 = vsub.s32 3, %v456
        %v458 = vrot.slane %v289, %v457
        %460 = vbcast.lane.b32.xlu0 %v458, 256
        %v461 = vpop.permute.xlu0 %460
        %s463 = sor.u32 256, 8
        %464 = vbcast.lane.b32.xlu0 %v458, %s463
        %v465 = vpop.permute.xlu0 %464
        %s467 = sor.u32 256, 16
        %468 = vbcast.lane.b32.xlu0 %v458, %s467
        %v469 = vpop.permute.xlu0 %468
        %s471 = sor.u32 256, 24
        %472 = vbcast.lane.b32.xlu0 %v458, %s471
        %v473 = vpop.permute.xlu0 %472
        %s475 = sor.u32 256, 32
        %476 = vbcast.lane.b32.xlu0 %v458, %s475
        %v477 = vpop.permute.xlu0 %476
        %s479 = sor.u32 256, 40
        %480 = vbcast.lane.b32.xlu0 %v458, %s479
        %v481 = vpop.permute.xlu0 %480
        %s483 = sor.u32 256, 48
        %484 = vbcast.lane.b32.xlu0 %v458, %s483
        %v485 = vpop.permute.xlu0 %484
        %s487 = sor.u32 256, 56
        %488 = vbcast.lane.b32.xlu0 %v458, %s487
        %v489 = vpop.permute.xlu0 %488
        %s491 = sor.u32 256, 64
        %492 = vbcast.lane.b32.xlu0 %v458, %s491
        %v493 = vpop.permute.xlu0 %492
        %s495 = sor.u32 256, 72
        %496 = vbcast.lane.b32.xlu0 %v458, %s495
        %v497 = vpop.permute.xlu0 %496
        %s499 = sor.u32 256, 80
        %500 = vbcast.lane.b32.xlu0 %v458, %s499
        %v501 = vpop.permute.xlu0 %500
        %s503 = sor.u32 256, 88
        %504 = vbcast.lane.b32.xlu0 %v458, %s503
        %v505 = vpop.permute.xlu0 %504
        %s507 = sor.u32 256, 96
        %508 = vbcast.lane.b32.xlu0 %v458, %s507
        %v509 = vpop.permute.xlu0 %508
        %v510 = vlaneseq
        %v511 = vshrl.u32 %v510, 7
        %v512 = vsub.s32 4, %v511
        %v513 = vrot.slane %v289, %v512
        %515 = vbcast.lane.b32.xlu0 %v513, 256
        %v516 = vpop.permute.xlu0 %515
        %s518 = sor.u32 256, 8
        %519 = vbcast.lane.b32.xlu0 %v513, %s518
        %v520 = vpop.permute.xlu0 %519
        %s522 = sor.u32 256, 16
        %523 = vbcast.lane.b32.xlu0 %v513, %s522
        %v524 = vpop.permute.xlu0 %523
        %s526 = sor.u32 256, 24
        %527 = vbcast.lane.b32.xlu0 %v513, %s526
        %v528 = vpop.permute.xlu0 %527
        %s530 = sor.u32 256, 32
        %531 = vbcast.lane.b32.xlu0 %v513, %s530
        %v532 = vpop.permute.xlu0 %531
        %s534 = sor.u32 256, 40
        %535 = vbcast.lane.b32.xlu0 %v513, %s534
        %v536 = vpop.permute.xlu0 %535
        %s538 = sor.u32 256, 48
        %539 = vbcast.lane.b32.xlu0 %v513, %s538
        %v540 = vpop.permute.xlu0 %539
        %s542 = sor.u32 256, 56
        %543 = vbcast.lane.b32.xlu0 %v513, %s542
        %v544 = vpop.permute.xlu0 %543
        %s546 = sor.u32 256, 64
        %547 = vbcast.lane.b32.xlu0 %v513, %s546
        %v548 = vpop.permute.xlu0 %547
        %s550 = sor.u32 256, 72
        %551 = vbcast.lane.b32.xlu0 %v513, %s550
        %v552 = vpop.permute.xlu0 %551
        %s554 = sor.u32 256, 80
        %555 = vbcast.lane.b32.xlu0 %v513, %s554
        %v556 = vpop.permute.xlu0 %555
        %s558 = sor.u32 256, 88
        %559 = vbcast.lane.b32.xlu0 %v513, %s558
        %v560 = vpop.permute.xlu0 %559
        %s562 = sor.u32 256, 96
        %563 = vbcast.lane.b32.xlu0 %v513, %s562
        %v564 = vpop.permute.xlu0 %563
        %v565 = vlaneseq
        %v566 = vshrl.u32 %v565, 7
        %v567 = vsub.s32 5, %v566
        %v568 = vrot.slane %v289, %v567
        %570 = vbcast.lane.b32.xlu0 %v568, 256
        %v571 = vpop.permute.xlu0 %570
        %s573 = sor.u32 256, 8
        %574 = vbcast.lane.b32.xlu0 %v568, %s573
        %v575 = vpop.permute.xlu0 %574
        %s577 = sor.u32 256, 16
        %578 = vbcast.lane.b32.xlu0 %v568, %s577
        %v579 = vpop.permute.xlu0 %578
        %s581 = sor.u32 256, 24
        %582 = vbcast.lane.b32.xlu0 %v568, %s581
        %v583 = vpop.permute.xlu0 %582
        %s585 = sor.u32 256, 32
        %586 = vbcast.lane.b32.xlu0 %v568, %s585
        %v587 = vpop.permute.xlu0 %586
        %s589 = sor.u32 256, 40
        %590 = vbcast.lane.b32.xlu0 %v568, %s589
        %v591 = vpop.permute.xlu0 %590
        %s593 = sor.u32 256, 48
        %594 = vbcast.lane.b32.xlu0 %v568, %s593
        %v595 = vpop.permute.xlu0 %594
        %s597 = sor.u32 256, 56
        %598 = vbcast.lane.b32.xlu0 %v568, %s597
        %v599 = vpop.permute.xlu0 %598
        %s601 = sor.u32 256, 64
        %602 = vbcast.lane.b32.xlu0 %v568, %s601
        %v603 = vpop.permute.xlu0 %602
        %s605 = sor.u32 256, 72
        %606 = vbcast.lane.b32.xlu0 %v568, %s605
        %v607 = vpop.permute.xlu0 %606
        %s609 = sor.u32 256, 80
        %610 = vbcast.lane.b32.xlu0 %v568, %s609
        %v611 = vpop.permute.xlu0 %610
        %s613 = sor.u32 256, 88
        %614 = vbcast.lane.b32.xlu0 %v568, %s613
        %v615 = vpop.permute.xlu0 %614
        %s617 = sor.u32 256, 96
        %618 = vbcast.lane.b32.xlu0 %v568, %s617
        %v619 = vpop.permute.xlu0 %618
        %v620 = vlaneseq
        %v621 = vshrl.u32 %v620, 7
        %v622 = vsub.s32 6, %v621
        %v623 = vrot.slane %v289, %v622
        %625 = vbcast.lane.b32.xlu0 %v623, 256
        %v626 = vpop.permute.xlu0 %625
        %s628 = sor.u32 256, 8
        %629 = vbcast.lane.b32.xlu0 %v623, %s628
        %v630 = vpop.permute.xlu0 %629
        %s632 = sor.u32 256, 16
        %633 = vbcast.lane.b32.xlu0 %v623, %s632
        %v634 = vpop.permute.xlu0 %633
        %s636 = sor.u32 256, 24
        %637 = vbcast.lane.b32.xlu0 %v623, %s636
        %v638 = vpop.permute.xlu0 %637
        %s640 = sor.u32 256, 32
        %641 = vbcast.lane.b32.xlu0 %v623, %s640
        %v642 = vpop.permute.xlu0 %641
        %s644 = sor.u32 256, 40
        %645 = vbcast.lane.b32.xlu0 %v623, %s644
        %v646 = vpop.permute.xlu0 %645
        %s648 = sor.u32 256, 48
        %649 = vbcast.lane.b32.xlu0 %v623, %s648
        %v650 = vpop.permute.xlu0 %649
        %s652 = sor.u32 256, 56
        %653 = vbcast.lane.b32.xlu0 %v623, %s652
        %v654 = vpop.permute.xlu0 %653
        %s656 = sor.u32 256, 64
        %657 = vbcast.lane.b32.xlu0 %v623, %s656
        %v658 = vpop.permute.xlu0 %657
        %s660 = sor.u32 256, 72
        %661 = vbcast.lane.b32.xlu0 %v623, %s660
        %v662 = vpop.permute.xlu0 %661
        %s664 = sor.u32 256, 80
        %665 = vbcast.lane.b32.xlu0 %v623, %s664
        %v666 = vpop.permute.xlu0 %665
        %s668 = sor.u32 256, 88
        %669 = vbcast.lane.b32.xlu0 %v623, %s668
        %v670 = vpop.permute.xlu0 %669
        %s672 = sor.u32 256, 96
        %673 = vbcast.lane.b32.xlu0 %v623, %s672
        %v674 = vpop.permute.xlu0 %673
        %v675 = vlaneseq
        %v676 = vshrl.u32 %v675, 7
        %v677 = vsub.s32 7, %v676
        %v678 = vrot.slane %v289, %v677
        %680 = vbcast.lane.b32.xlu0 %v678, 256
        %v681 = vpop.permute.xlu0 %680
        %s683 = sor.u32 256, 8
        %684 = vbcast.lane.b32.xlu0 %v678, %s683
        %v685 = vpop.permute.xlu0 %684
        %s687 = sor.u32 256, 16
        %688 = vbcast.lane.b32.xlu0 %v678, %s687
        %v689 = vpop.permute.xlu0 %688
        %s691 = sor.u32 256, 24
        %692 = vbcast.lane.b32.xlu0 %v678, %s691
        %v693 = vpop.permute.xlu0 %692
        %s695 = sor.u32 256, 32
        %696 = vbcast.lane.b32.xlu0 %v678, %s695
        %v697 = vpop.permute.xlu0 %696
        %s699 = sor.u32 256, 40
        %700 = vbcast.lane.b32.xlu0 %v678, %s699
        %v701 = vpop.permute.xlu0 %700
        %s703 = sor.u32 256, 48
        %704 = vbcast.lane.b32.xlu0 %v678, %s703
        %v705 = vpop.permute.xlu0 %704
        %s707 = sor.u32 256, 56
        %708 = vbcast.lane.b32.xlu0 %v678, %s707
        %v709 = vpop.permute.xlu0 %708
        %s711 = sor.u32 256, 64
        %712 = vbcast.lane.b32.xlu0 %v678, %s711
        %v713 = vpop.permute.xlu0 %712
        %s715 = sor.u32 256, 72
        %716 = vbcast.lane.b32.xlu0 %v678, %s715
        %v717 = vpop.permute.xlu0 %716
        %s719 = sor.u32 256, 80
        %720 = vbcast.lane.b32.xlu0 %v678, %s719
        %v721 = vpop.permute.xlu0 %720
        %s723 = sor.u32 256, 88
        %724 = vbcast.lane.b32.xlu0 %v678, %s723
        %v725 = vpop.permute.xlu0 %724
        %s727 = sor.u32 256, 96
        %728 = vbcast.lane.b32.xlu0 %v678, %s727
        %v729 = vpop.permute.xlu0 %728
        %v730 = vld [vmem:[%s232] sm:$0xff]
        %v731 = vlaneseq
        %v732 = vshrl.u32 %v731, 7
        %v733 = vsub.s32 0, %v732
        %v734 = vrot.slane %v730, %v733
        %736 = vbcast.lane.b32.xlu0 %v734, 256
        %v737 = vpop.permute.xlu0 %736
        %s739 = sor.u32 256, 8
        %740 = vbcast.lane.b32.xlu0 %v734, %s739
        %v741 = vpop.permute.xlu0 %740
        %s743 = sor.u32 256, 16
        %744 = vbcast.lane.b32.xlu0 %v734, %s743
        %v745 = vpop.permute.xlu0 %744
        %s747 = sor.u32 256, 24
        %748 = vbcast.lane.b32.xlu0 %v734, %s747
        %v749 = vpop.permute.xlu0 %748
        %s751 = sor.u32 256, 32
        %752 = vbcast.lane.b32.xlu0 %v734, %s751
        %v753 = vpop.permute.xlu0 %752
        %s755 = sor.u32 256, 40
        %756 = vbcast.lane.b32.xlu0 %v734, %s755
        %v757 = vpop.permute.xlu0 %756
        %s759 = sor.u32 256, 48
        %760 = vbcast.lane.b32.xlu0 %v734, %s759
        %v761 = vpop.permute.xlu0 %760
        %s763 = sor.u32 256, 56
        %764 = vbcast.lane.b32.xlu0 %v734, %s763
        %v765 = vpop.permute.xlu0 %764
        %s767 = sor.u32 256, 64
        %768 = vbcast.lane.b32.xlu0 %v734, %s767
        %v769 = vpop.permute.xlu0 %768
        %s771 = sor.u32 256, 72
        %772 = vbcast.lane.b32.xlu0 %v734, %s771
        %v773 = vpop.permute.xlu0 %772
        %s775 = sor.u32 256, 80
        %776 = vbcast.lane.b32.xlu0 %v734, %s775
        %v777 = vpop.permute.xlu0 %776
        %s779 = sor.u32 256, 88
        %780 = vbcast.lane.b32.xlu0 %v734, %s779
        %v781 = vpop.permute.xlu0 %780
        %s783 = sor.u32 256, 96
        %784 = vbcast.lane.b32.xlu0 %v734, %s783
        %v785 = vpop.permute.xlu0 %784
        %v786 = vlaneseq
        %v787 = vshrl.u32 %v786, 7
        %v788 = vsub.s32 1, %v787
        %v789 = vrot.slane %v730, %v788
        %791 = vbcast.lane.b32.xlu0 %v789, 256
        %v792 = vpop.permute.xlu0 %791
        %s794 = sor.u32 256, 8
        %795 = vbcast.lane.b32.xlu0 %v789, %s794
        %v796 = vpop.permute.xlu0 %795
        %s798 = sor.u32 256, 16
        %799 = vbcast.lane.b32.xlu0 %v789, %s798
        %v800 = vpop.permute.xlu0 %799
        %s802 = sor.u32 256, 24
        %803 = vbcast.lane.b32.xlu0 %v789, %s802
        %v804 = vpop.permute.xlu0 %803
        %s806 = sor.u32 256, 32
        %807 = vbcast.lane.b32.xlu0 %v789, %s806
        %v808 = vpop.permute.xlu0 %807
        %s810 = sor.u32 256, 40
        %811 = vbcast.lane.b32.xlu0 %v789, %s810
        %v812 = vpop.permute.xlu0 %811
        %s814 = sor.u32 256, 48
        %815 = vbcast.lane.b32.xlu0 %v789, %s814
        %v816 = vpop.permute.xlu0 %815
        %s818 = sor.u32 256, 56
        %819 = vbcast.lane.b32.xlu0 %v789, %s818
        %v820 = vpop.permute.xlu0 %819
        %s822 = sor.u32 256, 64
        %823 = vbcast.lane.b32.xlu0 %v789, %s822
        %v824 = vpop.permute.xlu0 %823
        %s826 = sor.u32 256, 72
        %827 = vbcast.lane.b32.xlu0 %v789, %s826
        %v828 = vpop.permute.xlu0 %827
        %s830 = sor.u32 256, 80
        %831 = vbcast.lane.b32.xlu0 %v789, %s830
        %v832 = vpop.permute.xlu0 %831
        %s834 = sor.u32 256, 88
        %835 = vbcast.lane.b32.xlu0 %v789, %s834
        %v836 = vpop.permute.xlu0 %835
        %s838 = sor.u32 256, 96
        %839 = vbcast.lane.b32.xlu0 %v789, %s838
        %v840 = vpop.permute.xlu0 %839
        %v841 = vlaneseq
        %v842 = vshrl.u32 %v841, 7
        %v843 = vsub.s32 2, %v842
        %v844 = vrot.slane %v730, %v843
        %846 = vbcast.lane.b32.xlu0 %v844, 256
        %v847 = vpop.permute.xlu0 %846
        %s849 = sor.u32 256, 8
        %850 = vbcast.lane.b32.xlu0 %v844, %s849
        %v851 = vpop.permute.xlu0 %850
        %s853 = sor.u32 256, 16
        %854 = vbcast.lane.b32.xlu0 %v844, %s853
        %v855 = vpop.permute.xlu0 %854
        %s857 = sor.u32 256, 24
        %858 = vbcast.lane.b32.xlu0 %v844, %s857
        %v859 = vpop.permute.xlu0 %858
        %s861 = sor.u32 256, 32
        %862 = vbcast.lane.b32.xlu0 %v844, %s861
        %v863 = vpop.permute.xlu0 %862
        %s865 = sor.u32 256, 40
        %866 = vbcast.lane.b32.xlu0 %v844, %s865
        %v867 = vpop.permute.xlu0 %866
        %s869 = sor.u32 256, 48
        %870 = vbcast.lane.b32.xlu0 %v844, %s869
        %v871 = vpop.permute.xlu0 %870
        %s873 = sor.u32 256, 56
        %874 = vbcast.lane.b32.xlu0 %v844, %s873
        %v875 = vpop.permute.xlu0 %874
        %s877 = sor.u32 256, 64
        %878 = vbcast.lane.b32.xlu0 %v844, %s877
        %v879 = vpop.permute.xlu0 %878
        %s881 = sor.u32 256, 72
        %882 = vbcast.lane.b32.xlu0 %v844, %s881
        %v883 = vpop.permute.xlu0 %882
        %s885 = sor.u32 256, 80
        %886 = vbcast.lane.b32.xlu0 %v844, %s885
        %v887 = vpop.permute.xlu0 %886
        %s889 = sor.u32 256, 88
        %890 = vbcast.lane.b32.xlu0 %v844, %s889
        %v891 = vpop.permute.xlu0 %890
        %s893 = sor.u32 256, 96
        %894 = vbcast.lane.b32.xlu0 %v844, %s893
        %v895 = vpop.permute.xlu0 %894
        %v896 = vlaneseq
        %v897 = vshrl.u32 %v896, 7
        %v898 = vsub.s32 3, %v897
        %v899 = vrot.slane %v730, %v898
        %901 = vbcast.lane.b32.xlu0 %v899, 256
        %v902 = vpop.permute.xlu0 %901
        %s904 = sor.u32 256, 8
        %905 = vbcast.lane.b32.xlu0 %v899, %s904
        %v906 = vpop.permute.xlu0 %905
        %s908 = sor.u32 256, 16
        %909 = vbcast.lane.b32.xlu0 %v899, %s908
        %v910 = vpop.permute.xlu0 %909
        %s912 = sor.u32 256, 24
        %913 = vbcast.lane.b32.xlu0 %v899, %s912
        %v914 = vpop.permute.xlu0 %913
        %s916 = sor.u32 256, 32
        %917 = vbcast.lane.b32.xlu0 %v899, %s916
        %v918 = vpop.permute.xlu0 %917
        %s920 = sor.u32 256, 40
        %921 = vbcast.lane.b32.xlu0 %v899, %s920
        %v922 = vpop.permute.xlu0 %921
        %s924 = sor.u32 256, 48
        %925 = vbcast.lane.b32.xlu0 %v899, %s924
        %v926 = vpop.permute.xlu0 %925
        %s928 = sor.u32 256, 56
        %929 = vbcast.lane.b32.xlu0 %v899, %s928
        %v930 = vpop.permute.xlu0 %929
        %s932 = sor.u32 256, 64
        %933 = vbcast.lane.b32.xlu0 %v899, %s932
        %v934 = vpop.permute.xlu0 %933
        %s936 = sor.u32 256, 72
        %937 = vbcast.lane.b32.xlu0 %v899, %s936
        %v938 = vpop.permute.xlu0 %937
        %s940 = sor.u32 256, 80
        %941 = vbcast.lane.b32.xlu0 %v899, %s940
        %v942 = vpop.permute.xlu0 %941
        %s944 = sor.u32 256, 88
        %945 = vbcast.lane.b32.xlu0 %v899, %s944
        %v946 = vpop.permute.xlu0 %945
        %s948 = sor.u32 256, 96
        %949 = vbcast.lane.b32.xlu0 %v899, %s948
        %v950 = vpop.permute.xlu0 %949
        %v951 = vlaneseq
        %v952 = vshrl.u32 %v951, 7
        %v953 = vsub.s32 4, %v952
        %v954 = vrot.slane %v730, %v953
        %956 = vbcast.lane.b32.xlu0 %v954, 256
        %v957 = vpop.permute.xlu0 %956
        %s959 = sor.u32 256, 8
        %960 = vbcast.lane.b32.xlu0 %v954, %s959
        %v961 = vpop.permute.xlu0 %960
        %s963 = sor.u32 256, 16
        %964 = vbcast.lane.b32.xlu0 %v954, %s963
        %v965 = vpop.permute.xlu0 %964
        %s967 = sor.u32 256, 24
        %968 = vbcast.lane.b32.xlu0 %v954, %s967
        %v969 = vpop.permute.xlu0 %968
        %s971 = sor.u32 256, 32
        %972 = vbcast.lane.b32.xlu0 %v954, %s971
        %v973 = vpop.permute.xlu0 %972
        %s975 = sor.u32 256, 40
        %976 = vbcast.lane.b32.xlu0 %v954, %s975
        %v977 = vpop.permute.xlu0 %976
        %s979 = sor.u32 256, 48
        %980 = vbcast.lane.b32.xlu0 %v954, %s979
        %v981 = vpop.permute.xlu0 %980
        %s983 = sor.u32 256, 56
        %984 = vbcast.lane.b32.xlu0 %v954, %s983
        %v985 = vpop.permute.xlu0 %984
        %s987 = sor.u32 256, 64
        %988 = vbcast.lane.b32.xlu0 %v954, %s987
        %v989 = vpop.permute.xlu0 %988
        %s991 = sor.u32 256, 72
        %992 = vbcast.lane.b32.xlu0 %v954, %s991
        %v993 = vpop.permute.xlu0 %992
        %s995 = sor.u32 256, 80
        %996 = vbcast.lane.b32.xlu0 %v954, %s995
        %v997 = vpop.permute.xlu0 %996
        %s999 = sor.u32 256, 88
        %1000 = vbcast.lane.b32.xlu0 %v954, %s999
        %v1001 = vpop.permute.xlu0 %1000
        %s1003 = sor.u32 256, 96
        %1004 = vbcast.lane.b32.xlu0 %v954, %s1003
        %v1005 = vpop.permute.xlu0 %1004
        %v1006 = vlaneseq
        %v1007 = vshrl.u32 %v1006, 7
        %v1008 = vsub.s32 5, %v1007
        %v1009 = vrot.slane %v730, %v1008
        %1011 = vbcast.lane.b32.xlu0 %v1009, 256
        %v1012 = vpop.permute.xlu0 %1011
        %s1014 = sor.u32 256, 8
        %1015 = vbcast.lane.b32.xlu0 %v1009, %s1014
        %v1016 = vpop.permute.xlu0 %1015
        %s1018 = sor.u32 256, 16
        %1019 = vbcast.lane.b32.xlu0 %v1009, %s1018
        %v1020 = vpop.permute.xlu0 %1019
        %s1022 = sor.u32 256, 24
        %1023 = vbcast.lane.b32.xlu0 %v1009, %s1022
        %v1024 = vpop.permute.xlu0 %1023
        %s1026 = sor.u32 256, 32
        %1027 = vbcast.lane.b32.xlu0 %v1009, %s1026
        %v1028 = vpop.permute.xlu0 %1027
        %s1030 = sor.u32 256, 40
        %1031 = vbcast.lane.b32.xlu0 %v1009, %s1030
        %v1032 = vpop.permute.xlu0 %1031
        %s1034 = sor.u32 256, 48
        %1035 = vbcast.lane.b32.xlu0 %v1009, %s1034
        %v1036 = vpop.permute.xlu0 %1035
        %s1038 = sor.u32 256, 56
        %1039 = vbcast.lane.b32.xlu0 %v1009, %s1038
        %v1040 = vpop.permute.xlu0 %1039
        %s1042 = sor.u32 256, 64
        %1043 = vbcast.lane.b32.xlu0 %v1009, %s1042
        %v1044 = vpop.permute.xlu0 %1043
        %s1046 = sor.u32 256, 72
        %1047 = vbcast.lane.b32.xlu0 %v1009, %s1046
        %v1048 = vpop.permute.xlu0 %1047
        %s1050 = sor.u32 256, 80
        %1051 = vbcast.lane.b32.xlu0 %v1009, %s1050
        %v1052 = vpop.permute.xlu0 %1051
        %s1054 = sor.u32 256, 88
        %1055 = vbcast.lane.b32.xlu0 %v1009, %s1054
        %v1056 = vpop.permute.xlu0 %1055
        %s1058 = sor.u32 256, 96
        %1059 = vbcast.lane.b32.xlu0 %v1009, %s1058
        %v1060 = vpop.permute.xlu0 %1059
        %v1061 = vlaneseq
        %v1062 = vshrl.u32 %v1061, 7
        %v1063 = vsub.s32 6, %v1062
        %v1064 = vrot.slane %v730, %v1063
        %1066 = vbcast.lane.b32.xlu0 %v1064, 256
        %v1067 = vpop.permute.xlu0 %1066
        %s1069 = sor.u32 256, 8
        %1070 = vbcast.lane.b32.xlu0 %v1064, %s1069
        %v1071 = vpop.permute.xlu0 %1070
        %s1073 = sor.u32 256, 16
        %1074 = vbcast.lane.b32.xlu0 %v1064, %s1073
        %v1075 = vpop.permute.xlu0 %1074
        %s1077 = sor.u32 256, 24
        %1078 = vbcast.lane.b32.xlu0 %v1064, %s1077
        %v1079 = vpop.permute.xlu0 %1078
        %s1081 = sor.u32 256, 32
        %1082 = vbcast.lane.b32.xlu0 %v1064, %s1081
        %v1083 = vpop.permute.xlu0 %1082
        %s1085 = sor.u32 256, 40
        %1086 = vbcast.lane.b32.xlu0 %v1064, %s1085
        %v1087 = vpop.permute.xlu0 %1086
        %s1089 = sor.u32 256, 48
        %1090 = vbcast.lane.b32.xlu0 %v1064, %s1089
        %v1091 = vpop.permute.xlu0 %1090
        %s1093 = sor.u32 256, 56
        %1094 = vbcast.lane.b32.xlu0 %v1064, %s1093
        %v1095 = vpop.permute.xlu0 %1094
        %s1097 = sor.u32 256, 64
        %1098 = vbcast.lane.b32.xlu0 %v1064, %s1097
        %v1099 = vpop.permute.xlu0 %1098
        %s1101 = sor.u32 256, 72
        %1102 = vbcast.lane.b32.xlu0 %v1064, %s1101
        %v1103 = vpop.permute.xlu0 %1102
        %s1105 = sor.u32 256, 80
        %1106 = vbcast.lane.b32.xlu0 %v1064, %s1105
        %v1107 = vpop.permute.xlu0 %1106
        %s1109 = sor.u32 256, 88
        %1110 = vbcast.lane.b32.xlu0 %v1064, %s1109
        %v1111 = vpop.permute.xlu0 %1110
        %s1113 = sor.u32 256, 96
        %1114 = vbcast.lane.b32.xlu0 %v1064, %s1113
        %v1115 = vpop.permute.xlu0 %1114
        %v1116 = vlaneseq
        %v1117 = vshrl.u32 %v1116, 7
        %v1118 = vsub.s32 7, %v1117
        %v1119 = vrot.slane %v730, %v1118
        %1121 = vbcast.lane.b32.xlu0 %v1119, 256
        %v1122 = vpop.permute.xlu0 %1121
        %s1124 = sor.u32 256, 8
        %1125 = vbcast.lane.b32.xlu0 %v1119, %s1124
        %v1126 = vpop.permute.xlu0 %1125
        %s1128 = sor.u32 256, 16
        %1129 = vbcast.lane.b32.xlu0 %v1119, %s1128
        %v1130 = vpop.permute.xlu0 %1129
        %s1132 = sor.u32 256, 24
        %1133 = vbcast.lane.b32.xlu0 %v1119, %s1132
        %v1134 = vpop.permute.xlu0 %1133
        %s1136 = sor.u32 256, 32
        %1137 = vbcast.lane.b32.xlu0 %v1119, %s1136
        %v1138 = vpop.permute.xlu0 %1137
        %s1140 = sor.u32 256, 40
        %1141 = vbcast.lane.b32.xlu0 %v1119, %s1140
        %v1142 = vpop.permute.xlu0 %1141
        %s1144 = sor.u32 256, 48
        %1145 = vbcast.lane.b32.xlu0 %v1119, %s1144
        %v1146 = vpop.permute.xlu0 %1145
        %s1148 = sor.u32 256, 56
        %1149 = vbcast.lane.b32.xlu0 %v1119, %s1148
        %v1150 = vpop.permute.xlu0 %1149
        %s1152 = sor.u32 256, 64
        %1153 = vbcast.lane.b32.xlu0 %v1119, %s1152
        %v1154 = vpop.permute.xlu0 %1153
        %s1156 = sor.u32 256, 72
        %1157 = vbcast.lane.b32.xlu0 %v1119, %s1156
        %v1158 = vpop.permute.xlu0 %1157
        %s1160 = sor.u32 256, 80
        %1161 = vbcast.lane.b32.xlu0 %v1119, %s1160
        %v1162 = vpop.permute.xlu0 %1161
        %s1164 = sor.u32 256, 88
        %1165 = vbcast.lane.b32.xlu0 %v1119, %s1164
        %v1166 = vpop.permute.xlu0 %1165
        %s1168 = sor.u32 256, 96
        %1169 = vbcast.lane.b32.xlu0 %v1119, %s1168
        %v1170 = vpop.permute.xlu0 %1169
        %v1171 = vld [vmem:[%s241] sm:$0x1]
        %v1172 = vld [vmem:[%s241 + $0x1] sm:$0x1]
        %v1173 = vld [vmem:[%s241 + $0x2] sm:$0x1]
        %v1174 = vld [vmem:[%s241 + $0x3] sm:$0x1]
        %v1175 = vld [vmem:[%s241 + $0x4] sm:$0x1]
        %v1176 = vld [vmem:[%s241 + $0x5] sm:$0x1]
        %v1177 = vld [vmem:[%s241 + $0x6] sm:$0x1]
        %v1178 = vld [vmem:[%s241 + $0x7] sm:$0x1]
        %v1187 = vlaneseq
        %v1188 = vshrl.u32 %v1187, 7
        %v1189 = vsub.s32 0, %v1188
        %v1190 = vrot.slane %v1171, %v1189
        %v1191 = vlaneseq
        %v1192 = vshrl.u32 %v1191, 7
        %v1193 = vsub.s32 0, %v1192
        %v1194 = vrot.slane %v1172, %v1193
        %v1195 = vlaneseq
        %v1196 = vshrl.u32 %v1195, 7
        %v1197 = vsub.s32 0, %v1196
        %v1198 = vrot.slane %v1173, %v1197
        %v1199 = vlaneseq
        %v1200 = vshrl.u32 %v1199, 7
        %v1201 = vsub.s32 0, %v1200
        %v1202 = vrot.slane %v1174, %v1201
        %v1203 = vlaneseq
        %v1204 = vshrl.u32 %v1203, 7
        %v1205 = vsub.s32 0, %v1204
        %v1206 = vrot.slane %v1175, %v1205
        %v1207 = vlaneseq
        %v1208 = vshrl.u32 %v1207, 7
        %v1209 = vsub.s32 0, %v1208
        %v1210 = vrot.slane %v1176, %v1209
        %v1211 = vlaneseq
        %v1212 = vshrl.u32 %v1211, 7
        %v1213 = vsub.s32 0, %v1212
        %v1214 = vrot.slane %v1177, %v1213
        %v1215 = vlaneseq
        %v1216 = vshrl.u32 %v1215, 7
        %v1217 = vsub.s32 0, %v1216
        %v1218 = vrot.slane %v1178, %v1217
        %v1227 = vmul.f32 %v296, %v1190
        %v1228 = vmul.f32 %v300, %v1190
        %v1229 = vmul.f32 %v304, %v1190
        %v1230 = vmul.f32 %v308, %v1190
        %v1231 = vmul.f32 %v312, %v1190
        %v1232 = vmul.f32 %v316, %v1190
        %v1233 = vmul.f32 %v320, %v1190
        %v1234 = vmul.f32 %v324, %v1190
        %v1235 = vmul.f32 %v328, %v1190
        %v1236 = vmul.f32 %v332, %v1190
        %v1237 = vmul.f32 %v336, %v1190
        %v1238 = vmul.f32 %v340, %v1190
        %v1239 = vmul.f32 %v344, %v1190
        %v1240 = vmul.f32 %v351, %v1194
        %v1241 = vmul.f32 %v355, %v1194
        %v1242 = vmul.f32 %v359, %v1194
        %v1243 = vmul.f32 %v363, %v1194
        %v1244 = vmul.f32 %v367, %v1194
        %v1245 = vmul.f32 %v371, %v1194
        %v1246 = vmul.f32 %v375, %v1194
        %v1247 = vmul.f32 %v379, %v1194
        %v1248 = vmul.f32 %v383, %v1194
        %v1249 = vmul.f32 %v387, %v1194
        %v1250 = vmul.f32 %v391, %v1194
        %v1251 = vmul.f32 %v395, %v1194
        %v1252 = vmul.f32 %v399, %v1194
        %v1253 = vmul.f32 %v406, %v1198
        %v1254 = vmul.f32 %v410, %v1198
        %v1255 = vmul.f32 %v414, %v1198
        %v1256 = vmul.f32 %v418, %v1198
        %v1257 = vmul.f32 %v422, %v1198
        %v1258 = vmul.f32 %v426, %v1198
        %v1259 = vmul.f32 %v430, %v1198
        %v1260 = vmul.f32 %v434, %v1198
        %v1261 = vmul.f32 %v438, %v1198
        %v1262 = vmul.f32 %v442, %v1198
        %v1263 = vmul.f32 %v446, %v1198
        %v1264 = vmul.f32 %v450, %v1198
        %v1265 = vmul.f32 %v454, %v1198
        %v1266 = vmul.f32 %v461, %v1202
        %v1267 = vmul.f32 %v465, %v1202
        %v1268 = vmul.f32 %v469, %v1202
        %v1269 = vmul.f32 %v473, %v1202
        %v1270 = vmul.f32 %v477, %v1202
        %v1271 = vmul.f32 %v481, %v1202
        %v1272 = vmul.f32 %v485, %v1202
        %v1273 = vmul.f32 %v489, %v1202
        %v1274 = vmul.f32 %v493, %v1202
        %v1275 = vmul.f32 %v497, %v1202
        %v1276 = vmul.f32 %v501, %v1202
        %v1277 = vmul.f32 %v505, %v1202
        %v1278 = vmul.f32 %v509, %v1202
        %v1279 = vmul.f32 %v516, %v1206
        %v1280 = vmul.f32 %v520, %v1206
        %v1281 = vmul.f32 %v524, %v1206
        %v1282 = vmul.f32 %v528, %v1206
        %v1283 = vmul.f32 %v532, %v1206
        %v1284 = vmul.f32 %v536, %v1206
        %v1285 = vmul.f32 %v540, %v1206
        %v1286 = vmul.f32 %v544, %v1206
        %v1287 = vmul.f32 %v548, %v1206
        %v1288 = vmul.f32 %v552, %v1206
        %v1289 = vmul.f32 %v556, %v1206
        %v1290 = vmul.f32 %v560, %v1206
        %v1291 = vmul.f32 %v564, %v1206
        %v1292 = vmul.f32 %v571, %v1210
        %v1293 = vmul.f32 %v575, %v1210
        %v1294 = vmul.f32 %v579, %v1210
        %v1295 = vmul.f32 %v583, %v1210
        %v1296 = vmul.f32 %v587, %v1210
        %v1297 = vmul.f32 %v591, %v1210
        %v1298 = vmul.f32 %v595, %v1210
        %v1299 = vmul.f32 %v599, %v1210
        %v1300 = vmul.f32 %v603, %v1210
        %v1301 = vmul.f32 %v607, %v1210
        %v1302 = vmul.f32 %v611, %v1210
        %v1303 = vmul.f32 %v615, %v1210
        %v1304 = vmul.f32 %v619, %v1210
        %v1305 = vmul.f32 %v626, %v1214
        %v1306 = vmul.f32 %v630, %v1214
        %v1307 = vmul.f32 %v634, %v1214
        %v1308 = vmul.f32 %v638, %v1214
        %v1309 = vmul.f32 %v642, %v1214
        %v1310 = vmul.f32 %v646, %v1214
        %v1311 = vmul.f32 %v650, %v1214
        %v1312 = vmul.f32 %v654, %v1214
        %v1313 = vmul.f32 %v658, %v1214
        %v1314 = vmul.f32 %v662, %v1214
        %v1315 = vmul.f32 %v666, %v1214
        %v1316 = vmul.f32 %v670, %v1214
        %v1317 = vmul.f32 %v674, %v1214
        %v1318 = vmul.f32 %v681, %v1218
        %v1319 = vmul.f32 %v685, %v1218
        %v1320 = vmul.f32 %v689, %v1218
        %v1321 = vmul.f32 %v693, %v1218
        %v1322 = vmul.f32 %v697, %v1218
        %v1323 = vmul.f32 %v701, %v1218
        %v1324 = vmul.f32 %v705, %v1218
        %v1325 = vmul.f32 %v709, %v1218
        %v1326 = vmul.f32 %v713, %v1218
        %v1327 = vmul.f32 %v717, %v1218
        %v1328 = vmul.f32 %v721, %v1218
        %v1329 = vmul.f32 %v725, %v1218
        %v1330 = vmul.f32 %v729, %v1218
        %v1331 = vadd.f32 %v1227, %v737
        %v1332 = vadd.f32 %v1228, %v741
        %v1333 = vadd.f32 %v1229, %v745
        %v1334 = vadd.f32 %v1230, %v749
        %v1335 = vadd.f32 %v1231, %v753
        %v1336 = vadd.f32 %v1232, %v757
        %v1337 = vadd.f32 %v1233, %v761
        %v1338 = vadd.f32 %v1234, %v765
        %v1339 = vadd.f32 %v1235, %v769
        %v1340 = vadd.f32 %v1236, %v773
        %v1341 = vadd.f32 %v1237, %v777
        %v1342 = vadd.f32 %v1238, %v781
        %v1343 = vadd.f32 %v1239, %v785
        %v1344 = vadd.f32 %v1240, %v792
        %v1345 = vadd.f32 %v1241, %v796
        %v1346 = vadd.f32 %v1242, %v800
        %v1347 = vadd.f32 %v1243, %v804
        %v1348 = vadd.f32 %v1244, %v808
        %v1349 = vadd.f32 %v1245, %v812
        %v1350 = vadd.f32 %v1246, %v816
        %v1351 = vadd.f32 %v1247, %v820
        %v1352 = vadd.f32 %v1248, %v824
        %v1353 = vadd.f32 %v1249, %v828
        %v1354 = vadd.f32 %v1250, %v832
        %v1355 = vadd.f32 %v1251, %v836
        %v1356 = vadd.f32 %v1252, %v840
        %v1357 = vadd.f32 %v1253, %v847
        %v1358 = vadd.f32 %v1254, %v851
        %v1359 = vadd.f32 %v1255, %v855
        %v1360 = vadd.f32 %v1256, %v859
        %v1361 = vadd.f32 %v1257, %v863
        %v1362 = vadd.f32 %v1258, %v867
        %v1363 = vadd.f32 %v1259, %v871
        %v1364 = vadd.f32 %v1260, %v875
        %v1365 = vadd.f32 %v1261, %v879
        %v1366 = vadd.f32 %v1262, %v883
        %v1367 = vadd.f32 %v1263, %v887
        %v1368 = vadd.f32 %v1264, %v891
        %v1369 = vadd.f32 %v1265, %v895
        %v1370 = vadd.f32 %v1266, %v902
        %v1371 = vadd.f32 %v1267, %v906
        %v1372 = vadd.f32 %v1268, %v910
        %v1373 = vadd.f32 %v1269, %v914
        %v1374 = vadd.f32 %v1270, %v918
        %v1375 = vadd.f32 %v1271, %v922
        %v1376 = vadd.f32 %v1272, %v926
        %v1377 = vadd.f32 %v1273, %v930
        %v1378 = vadd.f32 %v1274, %v934
        %v1379 = vadd.f32 %v1275, %v938
        %v1380 = vadd.f32 %v1276, %v942
        %v1381 = vadd.f32 %v1277, %v946
        %v1382 = vadd.f32 %v1278, %v950
        %v1383 = vadd.f32 %v1279, %v957
        %v1384 = vadd.f32 %v1280, %v961
        %v1385 = vadd.f32 %v1281, %v965
        %v1386 = vadd.f32 %v1282, %v969
        %v1387 = vadd.f32 %v1283, %v973
        %v1388 = vadd.f32 %v1284, %v977
        %v1389 = vadd.f32 %v1285, %v981
        %v1390 = vadd.f32 %v1286, %v985
        %v1391 = vadd.f32 %v1287, %v989
        %v1392 = vadd.f32 %v1288, %v993
        %v1393 = vadd.f32 %v1289, %v997
        %v1394 = vadd.f32 %v1290, %v1001
        %v1395 = vadd.f32 %v1291, %v1005
        %v1396 = vadd.f32 %v1292, %v1012
        %v1397 = vadd.f32 %v1293, %v1016
        %v1398 = vadd.f32 %v1294, %v1020
        %v1399 = vadd.f32 %v1295, %v1024
        %v1400 = vadd.f32 %v1296, %v1028
        %v1401 = vadd.f32 %v1297, %v1032
        %v1402 = vadd.f32 %v1298, %v1036
        %v1403 = vadd.f32 %v1299, %v1040
        %v1404 = vadd.f32 %v1300, %v1044
        %v1405 = vadd.f32 %v1301, %v1048
        %v1406 = vadd.f32 %v1302, %v1052
        %v1407 = vadd.f32 %v1303, %v1056
        %v1408 = vadd.f32 %v1304, %v1060
        %v1409 = vadd.f32 %v1305, %v1067
        %v1410 = vadd.f32 %v1306, %v1071
        %v1411 = vadd.f32 %v1307, %v1075
        %v1412 = vadd.f32 %v1308, %v1079
        %v1413 = vadd.f32 %v1309, %v1083
        %v1414 = vadd.f32 %v1310, %v1087
        %v1415 = vadd.f32 %v1311, %v1091
        %v1416 = vadd.f32 %v1312, %v1095
        %v1417 = vadd.f32 %v1313, %v1099
        %v1418 = vadd.f32 %v1314, %v1103
        %v1419 = vadd.f32 %v1315, %v1107
        %v1420 = vadd.f32 %v1316, %v1111
        %v1421 = vadd.f32 %v1317, %v1115
        %v1422 = vadd.f32 %v1318, %v1122
        %v1423 = vadd.f32 %v1319, %v1126
        %v1424 = vadd.f32 %v1320, %v1130
        %v1425 = vadd.f32 %v1321, %v1134
        %v1426 = vadd.f32 %v1322, %v1138
        %v1427 = vadd.f32 %v1323, %v1142
        %v1428 = vadd.f32 %v1324, %v1146
        %v1429 = vadd.f32 %v1325, %v1150
        %v1430 = vadd.f32 %v1326, %v1154
        %v1431 = vadd.f32 %v1327, %v1158
        %v1432 = vadd.f32 %v1328, %v1162
        %v1433 = vadd.f32 %v1329, %v1166
        %v1434 = vadd.f32 %v1330, %v1170
        %1435 = vst [vmem:[%s287] sm:$0xff] %v1331
        %1436 = vst [vmem:[%s287 + $0x8] sm:$0xff] %v1332
        %1437 = vst [vmem:[%s287 + $0x10] sm:$0xff] %v1333
        %1438 = vst [vmem:[%s287 + $0x18] sm:$0xff] %v1334
        %1439 = vst [vmem:[%s287 + $0x20] sm:$0xff] %v1335
        %1440 = vst [vmem:[%s287 + $0x28] sm:$0xff] %v1336
        %1441 = vst [vmem:[%s287 + $0x30] sm:$0xff] %v1337
        %1442 = vst [vmem:[%s287 + $0x38] sm:$0xff] %v1338
        %1443 = vst [vmem:[%s287 + $0x40] sm:$0xff] %v1339
        %1444 = vst [vmem:[%s287 + $0x48] sm:$0xff] %v1340
        %1445 = vst [vmem:[%s287 + $0x50] sm:$0xff] %v1341
        %1446 = vst [vmem:[%s287 + $0x58] sm:$0xff] %v1342
        %1447 = vst [vmem:[%s287 + $0x60] sm:$0xf] %v1343
        %1448 = vst [vmem:[%s287 + $0x68] sm:$0xff] %v1344
        %1449 = vst [vmem:[%s287 + $0x70] sm:$0xff] %v1345
        %1450 = vst [vmem:[%s287 + $0x78] sm:$0xff] %v1346
        %1451 = vst [vmem:[%s287 + $0x80] sm:$0xff] %v1347
        %1452 = vst [vmem:[%s287 + $0x88] sm:$0xff] %v1348
        %1453 = vst [vmem:[%s287 + $0x90] sm:$0xff] %v1349
        %1454 = vst [vmem:[%s287 + $0x98] sm:$0xff] %v1350
        %1455 = vst [vmem:[%s287 + $0xa0] sm:$0xff] %v1351
        %1456 = vst [vmem:[%s287 + $0xa8] sm:$0xff] %v1352
        %1457 = vst [vmem:[%s287 + $0xb0] sm:$0xff] %v1353
        %1458 = vst [vmem:[%s287 + $0xb8] sm:$0xff] %v1354
        %1459 = vst [vmem:[%s287 + $0xc0] sm:$0xff] %v1355
        %1460 = vst [vmem:[%s287 + $0xc8] sm:$0xf] %v1356
        %1461 = vst [vmem:[%s287 + $0xd0] sm:$0xff] %v1357
        %1462 = vst [vmem:[%s287 + $0xd8] sm:$0xff] %v1358
        %1463 = vst [vmem:[%s287 + $0xe0] sm:$0xff] %v1359
        %1464 = vst [vmem:[%s287 + $0xe8] sm:$0xff] %v1360
        %1465 = vst [vmem:[%s287 + $0xf0] sm:$0xff] %v1361
        %1466 = vst [vmem:[%s287 + $0xf8] sm:$0xff] %v1362
        %1467 = vst [vmem:[%s287 + $0x100] sm:$0xff] %v1363
        %1468 = vst [vmem:[%s287 + $0x108] sm:$0xff] %v1364
        %1469 = vst [vmem:[%s287 + $0x110] sm:$0xff] %v1365
        %1470 = vst [vmem:[%s287 + $0x118] sm:$0xff] %v1366
        %1471 = vst [vmem:[%s287 + $0x120] sm:$0xff] %v1367
        %1472 = vst [vmem:[%s287 + $0x128] sm:$0xff] %v1368
        %1473 = vst [vmem:[%s287 + $0x130] sm:$0xf] %v1369
        %1474 = vst [vmem:[%s287 + $0x138] sm:$0xff] %v1370
        %1475 = vst [vmem:[%s287 + $0x140] sm:$0xff] %v1371
        %1476 = vst [vmem:[%s287 + $0x148] sm:$0xff] %v1372
        %1477 = vst [vmem:[%s287 + $0x150] sm:$0xff] %v1373
        %1478 = vst [vmem:[%s287 + $0x158] sm:$0xff] %v1374
        %1479 = vst [vmem:[%s287 + $0x160] sm:$0xff] %v1375
        %1480 = vst [vmem:[%s287 + $0x168] sm:$0xff] %v1376
        %1481 = vst [vmem:[%s287 + $0x170] sm:$0xff] %v1377
        %1482 = vst [vmem:[%s287 + $0x178] sm:$0xff] %v1378
        %1483 = vst [vmem:[%s287 + $0x180] sm:$0xff] %v1379
        %1484 = vst [vmem:[%s287 + $0x188] sm:$0xff] %v1380
        %1485 = vst [vmem:[%s287 + $0x190] sm:$0xff] %v1381
        %1486 = vst [vmem:[%s287 + $0x198] sm:$0xf] %v1382
        %1487 = vst [vmem:[%s287 + $0x1a0] sm:$0xff] %v1383
        %1488 = vst [vmem:[%s287 + $0x1a8] sm:$0xff] %v1384
        %1489 = vst [vmem:[%s287 + $0x1b0] sm:$0xff] %v1385
        %1490 = vst [vmem:[%s287 + $0x1b8] sm:$0xff] %v1386
        %1491 = vst [vmem:[%s287 + $0x1c0] sm:$0xff] %v1387
        %1492 = vst [vmem:[%s287 + $0x1c8] sm:$0xff] %v1388
        %1493 = vst [vmem:[%s287 + $0x1d0] sm:$0xff] %v1389
        %1494 = vst [vmem:[%s287 + $0x1d8] sm:$0xff] %v1390
        %1495 = vst [vmem:[%s287 + $0x1e0] sm:$0xff] %v1391
        %1496 = vst [vmem:[%s287 + $0x1e8] sm:$0xff] %v1392
        %1497 = vst [vmem:[%s287 + $0x1f0] sm:$0xff] %v1393
        %1498 = vst [vmem:[%s287 + $0x1f8] sm:$0xff] %v1394
        %1499 = vst [vmem:[%s287 + $0x200] sm:$0xf] %v1395
        %1500 = vst [vmem:[%s287 + $0x208] sm:$0xff] %v1396
        %1501 = vst [vmem:[%s287 + $0x210] sm:$0xff] %v1397
        %1502 = vst [vmem:[%s287 + $0x218] sm:$0xff] %v1398
        %1503 = vst [vmem:[%s287 + $0x220] sm:$0xff] %v1399
        %1504 = vst [vmem:[%s287 + $0x228] sm:$0xff] %v1400
        %1505 = vst [vmem:[%s287 + $0x230] sm:$0xff] %v1401
        %1506 = vst [vmem:[%s287 + $0x238] sm:$0xff] %v1402
        %1507 = vst [vmem:[%s287 + $0x240] sm:$0xff] %v1403
        %1508 = vst [vmem:[%s287 + $0x248] sm:$0xff] %v1404
        %1509 = vst [vmem:[%s287 + $0x250] sm:$0xff] %v1405
        %1510 = vst [vmem:[%s287 + $0x258] sm:$0xff] %v1406
        %1511 = vst [vmem:[%s287 + $0x260] sm:$0xff] %v1407
        %1512 = vst [vmem:[%s287 + $0x268] sm:$0xf] %v1408
        %1513 = vst [vmem:[%s287 + $0x270] sm:$0xff] %v1409
        %1514 = vst [vmem:[%s287 + $0x278] sm:$0xff] %v1410
        %1515 = vst [vmem:[%s287 + $0x280] sm:$0xff] %v1411
        %1516 = vst [vmem:[%s287 + $0x288] sm:$0xff] %v1412
        %1517 = vst [vmem:[%s287 + $0x290] sm:$0xff] %v1413
        %1518 = vst [vmem:[%s287 + $0x298] sm:$0xff] %v1414
        %1519 = vst [vmem:[%s287 + $0x2a0] sm:$0xff] %v1415
        %1520 = vst [vmem:[%s287 + $0x2a8] sm:$0xff] %v1416
        %1521 = vst [vmem:[%s287 + $0x2b0] sm:$0xff] %v1417
        %1522 = vst [vmem:[%s287 + $0x2b8] sm:$0xff] %v1418
        %1523 = vst [vmem:[%s287 + $0x2c0] sm:$0xff] %v1419
        %1524 = vst [vmem:[%s287 + $0x2c8] sm:$0xff] %v1420
        %1525 = vst [vmem:[%s287 + $0x2d0] sm:$0xf] %v1421
        %1526 = vst [vmem:[%s287 + $0x2d8] sm:$0xff] %v1422
        %1527 = vst [vmem:[%s287 + $0x2e0] sm:$0xff] %v1423
        %1528 = vst [vmem:[%s287 + $0x2e8] sm:$0xff] %v1424
        %1529 = vst [vmem:[%s287 + $0x2f0] sm:$0xff] %v1425
        %1530 = vst [vmem:[%s287 + $0x2f8] sm:$0xff] %v1426
        %1531 = vst [vmem:[%s287 + $0x300] sm:$0xff] %v1427
        %1532 = vst [vmem:[%s287 + $0x308] sm:$0xff] %v1428
        %1533 = vst [vmem:[%s287 + $0x310] sm:$0xff] %v1429
        %1534 = vst [vmem:[%s287 + $0x318] sm:$0xff] %v1430
        %1535 = vst [vmem:[%s287 + $0x320] sm:$0xff] %v1431
        %1536 = vst [vmem:[%s287 + $0x328] sm:$0xff] %v1432
        %1537 = vst [vmem:[%s287 + $0x330] sm:$0xff] %v1433
        %1538 = vst [vmem:[%s287 + $0x338] sm:$0xf] %v1434
        %s1539 = smul.u32 8, %s24
        %p1540 = scmp.lt.s32.totalorder %s1539, 31
        %s1541 = scalar_select %p1540, %s1539, 31
        %p1542 = scmp.lt.s32.totalorder %s25, 0
        %s1543 = scalar_select %p1542, %s25, 0
        %s1544 = smul.addr %s1541, 13
        %s1545 = sadd.s32 %s1543, %s1544
        %s1546 = smul.addr %s1545, 8
        %s1547 = scalar_lea.vmem %s3, %s1546
        // Predicated region
        $region45: #{tpu_custom_call.1} parent=31 // pred_check
          %p1548 = pneg %p132
        $region46: #{tpu_custom_call.1} parent=31 // pred_check_branch
          %1550 = sbr.rel (%p1548) target = $region48
        $region47: #{tpu_custom_call.1} parent=31 // pred_region
          %s1551 = smul.u32 8, %s24
        $region48: #{tpu_custom_call.1} parent=31 // pred_fallthru
          _
      $region32: #{tpu_custom_call.1} parent=5 // pred_fallthru
        _
      %p1552 = scmp.le.s32.totalorder 2, %s15
      // Predicated region
      $region49: #{tpu_custom_call.1} parent=5 // pred_check
        %p1553 = pneg %p1552
      $region50: #{tpu_custom_call.1} parent=5 // pred_check_branch
        %1555 = sbr.rel (%p1553) target = $region52
      $region51: #{tpu_custom_call.1} parent=5 // pred_region
        %s1556 = ssub.s32 %s15, 2
        // Predicated region
        $region53: #{tpu_custom_call.1} parent=51 // pred_check
          %p1557 = pneg %p138
        $region54: #{tpu_custom_call.1} parent=51 // pred_check_branch
          %1559 = sbr.rel (%p1557) target = $region56
        $region55: #{tpu_custom_call.1} parent=51 // pred_region
          %s1560 = smul.u32 8, %s26
          %p1561 = scmp.lt.s32.totalorder %s1560, 31
          %s1562 = scalar_select %p1561, %s1560, 31
          %p1563 = scmp.lt.s32.totalorder %s27, 0
          %s1564 = scalar_select %p1563, %s27, 0
          %s1565 = smul.addr %s1562, 13
          %s1566 = sadd.s32 %s1564, %s1565
          %s1567 = smul.addr %s1566, 8
          %s1568 = scalar_lea.vmem %s3, %s1567
        $region56: #{tpu_custom_call.1} parent=51 // pred_fallthru
          _
      $region52: #{tpu_custom_call.1} parent=5 // pred_fallthru
        _
    $region6: #{tpu_custom_call.1} parent=1 // loop_footer
      %s19 = sadd.s32 1, %s15
    $region7: #{tpu_custom_call.1} parent=1 // loop_footer_branch
      %14 = sbr.rel target = $region3
    $region8: #{tpu_custom_call.1} parent=1 // loop_exit
      _
    %1569 = vsyncpa [#allocation3], 1
    %s1570 = scalar_lea.sflag [#allocation3], 1
    %1571 = vsyncpa %s1570, 1
    %1572 = vsyncpa [#allocation5], 1
    %s1573 = scalar_lea.sflag [#allocation5], 1
    %1574 = vsyncpa %s1573, 1

</llo_original>
